<compile_context>
chip_gen: v6e
topology: v6e:2x2x1
jax: 0.10.0
libtpu: 0.0.40
codegen_flags: <defaults>
</compile_context>

<pallas_src>
import math
import functools

import jax
import jax.numpy as jnp
from jax.experimental import pallas as pl
from jax.experimental.pallas import tpu as pltpu


def _timestep_embedder_kernel(t_ref, w1_ref, b1_ref, w2_ref, b2_ref, out_ref,
                              *, half, log_max_period):
    """One grid step computes one (N, tn) column tile of the output."""
    t = t_ref[...]                                            # (N, 1) f32

    # Sinusoidal frequency table, generated on-chip (EUP exp, no HBM table).
    k = jax.lax.broadcasted_iota(jnp.int32, (1, half), 1).astype(jnp.float32)
    freqs = jnp.exp(k * (-log_max_period / half))             # (1, half)
    args = t * freqs                                          # (N, half)

    wdt = w1_ref.dtype
    cos_a = jnp.cos(args).astype(wdt)
    sin_a = jnp.sin(args).astype(wdt)

    # First Linear without materializing concat([cos, sin], axis=-1):
    #   emb @ W1 == cos(args) @ W1[:half] + sin(args) @ W1[half:2*half]
    h = (jnp.dot(cos_a, w1_ref[:half, :], preferred_element_type=jnp.float32)
         + jnp.dot(sin_a, w1_ref[half:2 * half, :],
                   preferred_element_type=jnp.float32)
         + b1_ref[...].astype(jnp.float32))                   # (N, H) f32
    h = h * jax.nn.sigmoid(h)                                 # SiLU in f32

    out = (jnp.dot(h.astype(w2_ref.dtype), w2_ref[...],
                   preferred_element_type=jnp.float32)
           + b2_ref[...].astype(jnp.float32))                 # (N, tn) f32
    out_ref[...] = out.astype(out_ref.dtype)


def _pick_col_tile(hidden, max_tile):
    """Largest multiple-of-128 divisor of `hidden` that is <= max_tile."""
    if hidden % 128 != 0 or hidden <= max(max_tile, 128):
        return hidden                       # single full-width block
    tn = max(128, (max_tile // 128) * 128)
    while hidden % tn != 0:
        tn -= 128
    return tn


def timestep_embedder_forward(t, params, *, frequency_embedding_size=256,
                              max_period=10000, max_col_tile=512):
    """t: (N,) float array.  params hold weights pre-transposed as (in, out).

    Returns (N, hidden) float32.
    """
    w1, b1, w2, b2 = params["w1"], params["b1"], params["w2"], params["b2"]
    freq_dim = frequency_embedding_size
    if w1.shape[0] != freq_dim:
        raise ValueError(
            "params['w1'] must be stored pre-transposed as "
            f"(frequency_embedding_size, hidden); got {w1.shape}")
    hidden = w1.shape[1]
    half = freq_dim // 2
    n = t.shape[0]

    t2d = t.astype(jnp.float32).reshape(n, 1)
    b1_2d = b1.reshape(1, hidden)
    b2_2d = b2.reshape(1, hidden)

    tn = _pick_col_tile(hidden, max_col_tile)
    num_tiles = hidden // tn
    itemsize = jnp.dtype(w1.dtype).itemsize

    # Advisory cost for XLA's scheduler (includes the per-tile recompute of
    # the small first Linear).
    cost = pl.CostEstimate(
        flops=2 * n * freq_dim * hidden * num_tiles + 2 * n * hidden * hidden,
        transcendentals=num_tiles * n * (3 * half + hidden),
        bytes_accessed=(w1.size + w2.size + b1.size + b2.size) * itemsize
        + n * 4 + n * hidden * 4,
    )

    # VMEM footprint: resident t/W1/b1 + double-buffered W2/b2/out tiles,
    # plus headroom for f32 intermediates (args/cos/sin/h).
    vmem_bytes = (
        (w1.size + b1.size) * itemsize + n * 128 * 4
        + 2 * (hidden * tn + tn) * itemsize
        + 2 * n * tn * 4
        + 6 * n * max(hidden, freq_dim) * 4
    )
    vmem_limit = int(min(max(2 * vmem_bytes, 16 * 1024 * 1024),
                         64 * 1024 * 1024))

    kernel = functools.partial(
        _timestep_embedder_kernel,
        half=half, log_max_period=float(math.log(max_period)))

    return pl.pallas_call(
        kernel,
        out_shape=jax.ShapeDtypeStruct((n, hidden), jnp.float32),
        grid=(num_tiles,),
        in_specs=[
            pl.BlockSpec((n, 1), lambda j: (0, 0)),              # t (resident)
            pl.BlockSpec((freq_dim, hidden), lambda j: (0, 0)),  # W1 (resident)
            pl.BlockSpec((1, hidden), lambda j: (0, 0)),         # b1 (resident)
            pl.BlockSpec((hidden, tn), lambda j: (0, j)),        # W2 column tile
            pl.BlockSpec((1, tn), lambda j: (0, j)),             # b2 tile
        ],
        out_specs=pl.BlockSpec((n, tn), lambda j: (0, j)),       # out tile
        compiler_params=pltpu.CompilerParams(
            dimension_semantics=("parallel",),
            vmem_limit_bytes=vmem_limit,
        ),
        cost_estimate=cost,
    )(t2d, w1, b1_2d, w2, b2_2d)


def init_params(key, hidden_size, frequency_embedding_size=256,
                dtype=jnp.float32):
    """nn.Linear-equivalent init, stored pre-transposed as (in, out).

    To import PyTorch weights (stored (out, in)), transpose ONCE at param
    conversion time: {"w1": w1_torch.T, "b1": b1_torch, "w2": w2_torch.T, ...}.
    """
    k1, k2, k3, k4 = jax.random.split(key, 4)
    s1 = 1.0 / math.sqrt(frequency_embedding_size)
    s2 = 1.0 / math.sqrt(hidden_size)
    p = {
        "w1": jax.random.uniform(k1, (frequency_embedding_size, hidden_size),
                                 jnp.float32, -s1, s1),
        "b1": jax.random.uniform(k2, (hidden_size,), jnp.float32, -s1, s1),
        "w2": jax.random.uniform(k3, (hidden_size, hidden_size),
                                 jnp.float32, -s2, s2),
        "b2": jax.random.uniform(k4, (hidden_size,), jnp.float32, -s2, s2),
    }
    return jax.tree_util.tree_map(lambda x: x.astype(dtype), p)


def _reference_forward(t, params, frequency_embedding_size=256,
                       max_period=10000):
    """Pure-JAX reference in f32 (params cast to f32, (in, out) layout)."""
    half = frequency_embedding_size // 2
    freqs = jnp.exp(
        -math.log(max_period) * jnp.arange(half, dtype=jnp.float32) / half)
    args = t.astype(jnp.float32)[:, None] * freqs[None]
    emb = jnp.concatenate([jnp.cos(args), jnp.sin(args)], axis=-1)
    if frequency_embedding_size % 2:
        emb = jnp.concatenate([emb, jnp.zeros_like(emb[:, :1])], axis=-1)
    w1 = params["w1"].astype(jnp.float32)
    b1 = params["b1"].astype(jnp.float32)
    w2 = params["w2"].astype(jnp.float32)
    b2 = params["b2"].astype(jnp.float32)
    h = emb @ w1 + b1
    h = h * jax.nn.sigmoid(h)
    return h @ w2 + b2


if __name__ == "__main__":
    hidden_size = 512
    freq_emb_size = 256
    n = 8

    key = jax.random.PRNGKey(0)
    kp, kt = jax.random.split(key)
    t = jax.random.uniform(kt, (n,), jnp.float32, 0.0, 1000.0)

    fwd = jax.jit(functools.partial(
        timestep_embedder_forward,
        frequency_embedding_size=freq_emb_size,
        max_period=10000,
        max_col_tile=128))   # small tile so the demo exercises the column grid

    # f32 weights: tight tolerance vs. the f32 reference.
    params_f32 = init_params(kp, hidden_size, freq_emb_size, dtype=jnp.float32)
    out_f32 = jax.block_until_ready(fwd(t, params_f32))
    ref_f32 = _reference_forward(t, params_f32, freq_emb_size, 10000)
    assert out_f32.shape == (n, hidden_size)
    assert out_f32.dtype == jnp.float32
    assert jnp.allclose(out_f32, ref_f32, atol=1e-4, rtol=1e-4)

    # bf16 weights (halves weight HBM traffic; the kernel is weight-BW bound).
    params_bf16 = jax.tree_util.tree_map(
        lambda x: x.astype(jnp.bfloat16), params_f32)
    out_bf16 = jax.block_until_ready(fwd(t, params_bf16))
    ref_bf16 = _reference_forward(t, params_bf16, freq_emb_size, 10000)
    assert jnp.allclose(out_bf16, ref_bf16, atol=2e-2, rtol=2e-2)

    # Single-block path (full-width tile) — the common small-hidden case.
    fwd_full = jax.jit(functools.partial(
        timestep_embedder_forward,
        frequency_embedding_size=freq_emb_size,
        max_period=10000,
        max_col_tile=512))
    out_full = jax.block_until_ready(fwd_full(t, params_f32))
    assert jnp.allclose(out_full, ref_f32, atol=1e-4, rtol=1e-4)

    print("KERNEL_OK")
</pallas_src>

<mosaic_0001>
module attributes {stable_mosaic.version = 11 : i64} {
  func.func @_timestep_embedder_kernel(%arg0: i32, %arg1: memref<8x1xf32, #tpu.memory_space<vmem>>, %arg2: memref<256x512xf32, #tpu.memory_space<vmem>>, %arg3: memref<1x512xf32, #tpu.memory_space<vmem>>, %arg4: memref<512x128xf32, #tpu.memory_space<vmem>>, %arg5: memref<1x128xf32, #tpu.memory_space<vmem>>, %arg6: memref<8x128xf32, #tpu.memory_space<vmem>>) attributes {dimension_semantics = [#tpu.dimension_semantics<parallel>], iteration_bounds = array<i64: 4>, scalar_prefetch = 0 : i64, scratch_operands = 0 : i64, tpu.core_type = #tpu.core_type<tc>, window_params = [{pipeline_mode = #tpu.pipeline_mode<synchronous>, transform_indices = @transform_0, window_bounds = array<i64: 8, 1>}, {pipeline_mode = #tpu.pipeline_mode<synchronous>, transform_indices = @transform_1, window_bounds = array<i64: 256, 512>}, {pipeline_mode = #tpu.pipeline_mode<synchronous>, transform_indices = @transform_2, window_bounds = array<i64: 1, 512>}, {transform_indices = @transform_3, window_bounds = array<i64: 512, 128>}, {transform_indices = @transform_4, window_bounds = array<i64: 1, 128>}, {transform_indices = @transform_5, window_bounds = array<i64: 8, 128>}]} {
    %c0 = arith.constant 0 : index
    %c0_0 = arith.constant 0 : index
    %0 = vector.load %arg1[%c0, %c0_0] : memref<8x1xf32, #tpu.memory_space<vmem>>, vector<8x1xf32>
    %1 = tpu.iota {dimensions = array<i32: 1>} : vector<1x128xi32>
    %2 = arith.sitofp %1 : vector<1x128xi32> to vector<1x128xf32>
    %cst = arith.constant -0.0719557852 : f32
    %3 = vector.broadcast %cst : f32 to vector<1x128xf32>
    %4 = arith.mulf %2, %3 : vector<1x128xf32>
    %5 = math.exp %4 : vector<1x128xf32>
    %6 = vector.broadcast %0 : vector<8x1xf32> to vector<8x128xf32>
    %7 = vector.broadcast %5 : vector<1x128xf32> to vector<8x128xf32>
    %8 = arith.mulf %6, %7 : vector<8x128xf32>
    %9 = math.cos %8 : vector<8x128xf32>
    %10 = math.sin %8 : vector<8x128xf32>
    %c0_1 = arith.constant 0 : index
    %c0_2 = arith.constant 0 : index
    %11 = vector.load %arg2[%c0_1, %c0_2] : memref<256x512xf32, #tpu.memory_space<vmem>>, vector<128x512xf32>
    %cst_3 = arith.constant dense<0.000000e+00> : vector<8x512xf32>
    %12 = tpu.matmul %9, %11, %cst_3 {dimension_numbers = #tpu.dot_dimension_numbers<[1], [0], [0], [1], [0, 0, 1, 1], [], []>} : vector<8x128xf32>, vector<128x512xf32>, vector<8x512xf32> -> vector<8x512xf32>
    %c128 = arith.constant 128 : index
    %c0_4 = arith.constant 0 : index
    %13 = vector.load %arg2[%c128, %c0_4] : memref<256x512xf32, #tpu.memory_space<vmem>>, vector<128x512xf32>
    %cst_5 = arith.constant dense<0.000000e+00> : vector<8x512xf32>
    %14 = tpu.matmul %10, %13, %cst_5 {dimension_numbers = #tpu.dot_dimension_numbers<[1], [0], [0], [1], [0, 0, 1, 1], [], []>} : vector<8x128xf32>, vector<128x512xf32>, vector<8x512xf32> -> vector<8x512xf32>
    %15 = arith.addf %12, %14 : vector<8x512xf32>
    %c0_6 = arith.constant 0 : index
    %c0_7 = arith.constant 0 : index
    %16 = vector.load %arg3[%c0_6, %c0_7] : memref<1x512xf32, #tpu.memory_space<vmem>>, vector<1x512xf32>
    %17 = vector.broadcast %16 : vector<1x512xf32> to vector<8x512xf32>
    %18 = arith.addf %15, %17 : vector<8x512xf32>
    %19 = arith.negf %18 : vector<8x512xf32>
    %20 = math.exp %19 : vector<8x512xf32>
    %cst_8 = arith.constant 1.000000e+00 : f32
    %21 = vector.broadcast %cst_8 : f32 to vector<8x512xf32>
    %22 = arith.addf %21, %20 : vector<8x512xf32>
    %23 = arith.divf %21, %22 : vector<8x512xf32>
    %24 = arith.mulf %18, %23 : vector<8x512xf32>
    %c0_9 = arith.constant 0 : index
    %c0_10 = arith.constant 0 : index
    %25 = vector.load %arg4[%c0_9, %c0_10] : memref<512x128xf32, #tpu.memory_space<vmem>>, vector<512x128xf32>
    %cst_11 = arith.constant dense<0.000000e+00> : vector<8x128xf32>
    %26 = tpu.matmul %24, %25, %cst_11 {dimension_numbers = #tpu.dot_dimension_numbers<[1], [0], [0], [1], [0, 0, 1, 1], [], []>} : vector<8x512xf32>, vector<512x128xf32>, vector<8x128xf32> -> vector<8x128xf32>
    %c0_12 = arith.constant 0 : index
    %c0_13 = arith.constant 0 : index
    %27 = vector.load %arg5[%c0_12, %c0_13] : memref<1x128xf32, #tpu.memory_space<vmem>>, vector<1x128xf32>
    %28 = vector.broadcast %27 : vector<1x128xf32> to vector<8x128xf32>
    %29 = arith.addf %26, %28 : vector<8x128xf32>
    %c0_14 = arith.constant 0 : index
    %c0_15 = arith.constant 0 : index
    %30 = vector.load %arg6[%c0_14, %c0_15] : memref<8x128xf32, #tpu.memory_space<vmem>>, vector<8x128xf32>
    tpu.vector_store %arg6[%c0_14, %c0_15], %29 {strides = array<i32>} : memref<8x128xf32, #tpu.memory_space<vmem>>, vector<8x128xf32>,
    return
  }
  func.func @transform_0(%arg0: i32) -> (i32, i32) {
    %c0_i32 = arith.constant 0 : i32
    %c0_i32_0 = arith.constant 0 : i32
    %c0_i32_1 = arith.constant 0 : i32
    return %c0_i32, %c0_i32_0 : i32, i32
  }
  func.func @transform_1(%arg0: i32) -> (i32, i32) {
    %c0_i32 = arith.constant 0 : i32
    %c0_i32_0 = arith.constant 0 : i32
    %c0_i32_1 = arith.constant 0 : i32
    return %c0_i32, %c0_i32_0 : i32, i32
  }
  func.func @transform_2(%arg0: i32) -> (i32, i32) {
    %c0_i32 = arith.constant 0 : i32
    %c0_i32_0 = arith.constant 0 : i32
    %c0_i32_1 = arith.constant 0 : i32
    return %c0_i32, %c0_i32_0 : i32, i32
  }
  func.func @transform_3(%arg0: i32) -> (i32, i32) {
    %c0_i32 = arith.constant 0 : i32
    %c0_i32_0 = arith.constant 0 : i32
    return %c0_i32, %arg0 : i32, i32
  }
  func.func @transform_4(%arg0: i32) -> (i32, i32) {
    %c0_i32 = arith.constant 0 : i32
    %c0_i32_0 = arith.constant 0 : i32
    return %c0_i32, %arg0 : i32, i32
  }
  func.func @transform_5(%arg0: i32) -> (i32, i32) {
    %c0_i32 = arith.constant 0 : i32
    %c0_i32_0 = arith.constant 0 : i32
    return %c0_i32, %arg0 : i32, i32
  }
}

</mosaic_0001>

<llo_original>
// kernel: timestep_embedder_forward.1
$region0: #{timestep_embedder_forward.1}
  #allocation0 [shape = 'u32[]', space=smem, size = 0x4, offset = 0x4, fixed_abs, tag = 'smem constant byte address 0x4 - core index']
  #allocation1 [shape = 'u32[144,128]{1,0:T(1,128)}', space=vmem, size = 0x12000, scoped, tag = 'internal scratch']
  %s0 = inlined_call_operand.vmem [shape: f32[8,1], index: 0, kind: input, shape index: {}]
  %s1 = inlined_call_operand.hbm [shape: f32[256,512], index: 1, kind: input, shape index: {}]
  %s2 = inlined_call_operand.vmem [shape: f32[1,512], index: 2, kind: input, shape index: {}]
  %s3 = inlined_call_operand.hbm [shape: f32[512,512], index: 3, kind: input, shape index: {}]
  %s4 = inlined_call_operand.vmem [shape: f32[1,512], index: 4, kind: input, shape index: {}]
  %s5 = inlined_call_operand.hbm [shape: f32[8,512], index: 5, kind: output, shape index: {}]
  %s6 = sld [smem:[#allocation0]]
  $region61: #{timestep_embedder_forward.1} parent=0
    _
  %s8 = ssub.s32 1, %s6
  %s9 = scalar_select 0, %s8, %s6
  $region1: #{timestep_embedder_forward.1} parent=0
    #allocation2 [shape = 'u8[524288]{0}', space=vmem, size = 0x80000, scoped, tag = 'input window, operand 1, single buffered']
    #allocation3 [shape = 's32[2]{0}', space=sflag, size = 0x8, scoped, tag = 'scoped memory for timestep_embedder_forward.1']
    #allocation4 [shape = 's32[2]{0}', space=sflag, size = 0x8, scoped, tag = 'scoped memory for timestep_embedder_forward.1']
    #allocation5 [shape = 'u8[524288]{0}', space=vmem, size = 0x80000, scoped, tag = 'input window, operand 3']
    #allocation6 [shape = 's32[2]{0}', space=sflag, size = 0x8, scoped, tag = 'scoped memory for timestep_embedder_forward.1']
    #allocation7 [shape = 'u8[8192]{0}', space=vmem, size = 0x2000, scoped, tag = 'output window, operand 0']
    %10 = vsyncpa [#allocation3], 0
    %11 = vsyncpa [#allocation6], 0
    %s12 = scalar_lea.sflag [#allocation6], 1
    %13 = vsyncpa %s12, 0
    %14 = vsyncpa [#allocation4], 0
    %s15 = scalar_lea.sflag [#allocation4], 1
    %16 = vsyncpa %s15, 0
    loop: start=0, step=1, limit=6
    $region2: #{timestep_embedder_forward.1} parent=1 // loop_pre_header
      _
    $region3: #{timestep_embedder_forward.1} parent=1 // loop_header
      %s18 = sphi 0, %s22
      %p19 = scmp.ge.s32.totalorder %s18, 6
      %s26 = sphi 0, %s26
      %s28 = sphi 0, %s26
      %s29 = sphi 0, %s28
      %s43 = sphi 0, %s29
      %s47 = sphi 0, %s47
      %s49 = sphi 0, %s47
      %s50 = sphi 0, %s49
      %s64 = sphi 0, %s50
      %s68 = sphi 0, %s68
      %s70 = sphi 0, %s68
      %s71 = sphi 0, %s70
      %s85 = sphi 0, %s71
      %s91 = sphi 0, %s93
      %s94 = sphi 0, %s91
      %s95 = sphi 0, %s94
      %s111 = sphi 0, %s95
      %s117 = sphi 0, %s119
      %s120 = sphi 0, %s117
      %s121 = sphi 0, %s120
      %s137 = sphi 0, %s121
      %s143 = sphi 0, %s145
      %s146 = sphi 0, %s143
      %s147 = sphi 0, %s146
      %s163 = sphi 0, %s147
    $region4: #{timestep_embedder_forward.1} parent=1 // loop_header_branch
      %21 = sbr.rel (%p19) target = $region8
    $region5: #{timestep_embedder_forward.1} parent=1 // loop_body
      %s23 = ssub.s32 %s18, 1
      %s24 = ssub.s32 %s18, 2
      %s25 = sadd.s32 %s18, 1
      %s27 = sadd.s32 %s26, 1
      %p30 = scmp.eq.s32.totalorder %s18, 3
      %p31 = scmp.ne.s32.totalorder %s26, %s28
      %p32 = scmp.eq.s32.totalorder %s18, 0
      %p33 = por %p31, %p32
      %p34 = scmp.ne.s32.totalorder %s26, %s28
      %p35 = scmp.eq.s32.totalorder %s23, 3
      %p36 = por %p34, %p35
      %p37 = scmp.ne.s32.totalorder %s28, %s29
      %p38 = scmp.eq.s32.totalorder %s23, 0
      %p39 = por %p37, %p38
      %p40 = scmp.ne.s32.totalorder %s28, %s29
      %p41 = scmp.eq.s32.totalorder %s24, 3
      %p42 = por %p40, %p41
      %p44 = scmp.ne.s32.totalorder %s29, %s43
      %p45 = scmp.eq.s32.totalorder %s24, 0
      %p46 = por %p44, %p45
      %s48 = sadd.s32 %s47, 1
      %p51 = scmp.eq.s32.totalorder %s18, 3
      %p52 = scmp.ne.s32.totalorder %s47, %s49
      %p53 = scmp.eq.s32.totalorder %s18, 0
      %p54 = por %p52, %p53
      %p55 = scmp.ne.s32.totalorder %s47, %s49
      %p56 = scmp.eq.s32.totalorder %s23, 3
      %p57 = por %p55, %p56
      %p58 = scmp.ne.s32.totalorder %s49, %s50
      %p59 = scmp.eq.s32.totalorder %s23, 0
      %p60 = por %p58, %p59
      %p61 = scmp.ne.s32.totalorder %s49, %s50
      %p62 = scmp.eq.s32.totalorder %s24, 3
      %p63 = por %p61, %p62
      %p65 = scmp.ne.s32.totalorder %s50, %s64
      %p66 = scmp.eq.s32.totalorder %s24, 0
      %p67 = por %p65, %p66
      %s69 = sadd.s32 %s68, 1
      %p72 = scmp.eq.s32.totalorder %s18, 3
      %p73 = scmp.ne.s32.totalorder %s68, %s70
      %p74 = scmp.eq.s32.totalorder %s18, 0
      %p75 = por %p73, %p74
      %p76 = scmp.ne.s32.totalorder %s68, %s70
      %p77 = scmp.eq.s32.totalorder %s23, 3
      %p78 = por %p76, %p77
      %p79 = scmp.ne.s32.totalorder %s70, %s71
      %p80 = scmp.eq.s32.totalorder %s23, 0
      %p81 = por %p79, %p80
      %p82 = scmp.ne.s32.totalorder %s70, %s71
      %p83 = scmp.eq.s32.totalorder %s24, 3
      %p84 = por %p82, %p83
      %p86 = scmp.ne.s32.totalorder %s71, %s85
      %p87 = scmp.eq.s32.totalorder %s24, 0
      %p88 = por %p86, %p87
      %s89 = ssub.s32 %s18, %s25
      %p90 = scmp.eq.s32.totalorder %s89, 0
      %s92 = sadd.s32 %s91, 1
      %s93 = scalar_select %p90, %s91, %s92
      %p96 = pneg %p90
      %p97 = scmp.eq.s32.totalorder %s18, 3
      %p98 = por %p96, %p97
      %p99 = scmp.ne.s32.totalorder %s91, %s94
      %p100 = scmp.eq.s32.totalorder %s18, 0
      %p101 = por %p99, %p100
      %p102 = scmp.ne.s32.totalorder %s91, %s94
      %p103 = scmp.eq.s32.totalorder %s23, 3
      %p104 = por %p102, %p103
      %p105 = scmp.ne.s32.totalorder %s94, %s95
      %p106 = scmp.eq.s32.totalorder %s23, 0
      %p107 = por %p105, %p106
      %p108 = scmp.ne.s32.totalorder %s94, %s95
      %p109 = scmp.eq.s32.totalorder %s24, 3
      %p110 = por %p108, %p109
      %p112 = scmp.ne.s32.totalorder %s95, %s111
      %p113 = scmp.eq.s32.totalorder %s24, 0
      %p114 = por %p112, %p113
      %s115 = ssub.s32 %s18, %s25
      %p116 = scmp.eq.s32.totalorder %s115, 0
      %s118 = sadd.s32 %s117, 1
      %s119 = scalar_select %p116, %s117, %s118
      %p122 = pneg %p116
      %p123 = scmp.eq.s32.totalorder %s18, 3
      %p124 = por %p122, %p123
      %p125 = scmp.ne.s32.totalorder %s117, %s120
      %p126 = scmp.eq.s32.totalorder %s18, 0
      %p127 = por %p125, %p126
      %p128 = scmp.ne.s32.totalorder %s117, %s120
      %p129 = scmp.eq.s32.totalorder %s23, 3
      %p130 = por %p128, %p129
      %p131 = scmp.ne.s32.totalorder %s120, %s121
      %p132 = scmp.eq.s32.totalorder %s23, 0
      %p133 = por %p131, %p132
      %p134 = scmp.ne.s32.totalorder %s120, %s121
      %p135 = scmp.eq.s32.totalorder %s24, 3
      %p136 = por %p134, %p135
      %p138 = scmp.ne.s32.totalorder %s121, %s137
      %p139 = scmp.eq.s32.totalorder %s24, 0
      %p140 = por %p138, %p139
      %s141 = ssub.s32 %s18, %s25
      %p142 = scmp.eq.s32.totalorder %s141, 0
      %s144 = sadd.s32 %s143, 1
      %s145 = scalar_select %p142, %s143, %s144
      %p148 = pneg %p142
      %p149 = scmp.eq.s32.totalorder %s18, 3
      %p150 = por %p148, %p149
      %p151 = scmp.ne.s32.totalorder %s143, %s146
      %p152 = scmp.eq.s32.totalorder %s18, 0
      %p153 = por %p151, %p152
      %p154 = scmp.ne.s32.totalorder %s143, %s146
      %p155 = scmp.eq.s32.totalorder %s23, 3
      %p156 = por %p154, %p155
      %p157 = scmp.ne.s32.totalorder %s146, %s147
      %p158 = scmp.eq.s32.totalorder %s23, 0
      %p159 = por %p157, %p158
      %p160 = scmp.ne.s32.totalorder %s146, %s147
      %p161 = scmp.eq.s32.totalorder %s24, 3
      %p162 = por %p160, %p161
      %p164 = scmp.ne.s32.totalorder %s147, %s163
      %p165 = scmp.eq.s32.totalorder %s24, 0
      %p166 = por %p164, %p165
      %p167 = scmp.le.s32.totalorder 1, %s18
      %p168 = scmp.lt.s32.totalorder %s18, 5
      %p169 = pnand %p167, %p168
      %p170 = pneg %p169
      // Predicated region
      $region9: #{timestep_embedder_forward.1} parent=5 // pred_check
        _
      $region10: #{timestep_embedder_forward.1} parent=5 // pred_check_branch
        %172 = sbr.rel (%p169) target = $region12
      $region11: #{timestep_embedder_forward.1} parent=5 // pred_region
        %s173 = ssub.s32 %s18, 1
        // Predicated region
        $region13: #{timestep_embedder_forward.1} parent=11 // pred_check
          %p174 = pneg %p39
        $region14: #{timestep_embedder_forward.1} parent=11 // pred_check_branch
          %176 = sbr.rel (%p174) target = $region16
        $region15: #{timestep_embedder_forward.1} parent=11 // pred_region
          _
        $region16: #{timestep_embedder_forward.1} parent=11 // pred_fallthru
          _
        // Predicated region
        $region17: #{timestep_embedder_forward.1} parent=11 // pred_check
          %p177 = pneg %p60
        $region18: #{timestep_embedder_forward.1} parent=11 // pred_check_branch
          %179 = sbr.rel (%p177) target = $region20
        $region19: #{timestep_embedder_forward.1} parent=11 // pred_region
          %s181 = ssub.s32 16384, 16384
          %182 = vsyncadd [#allocation3], %s181
          %s183 = sshll.u32 [#allocation2], 4
          %s184 = int_to_ptr.vmem [resolvable:$true] %s183
          %189 = dma.hbm_to_vmem [thread:$0]  %s1, 16384, %s184, [#allocation3], 512, 512, 32
        $region20: #{timestep_embedder_forward.1} parent=11 // pred_fallthru
          _
        // Predicated region
        $region21: #{timestep_embedder_forward.1} parent=11 // pred_check
          %p190 = pneg %p81
        $region22: #{timestep_embedder_forward.1} parent=11 // pred_check_branch
          %192 = sbr.rel (%p190) target = $region24
        $region23: #{timestep_embedder_forward.1} parent=11 // pred_region
          _
        $region24: #{timestep_embedder_forward.1} parent=11 // pred_fallthru
          _
      $region12: #{timestep_embedder_forward.1} parent=5 // pred_fallthru
        _
      %p193 = scmp.lt.s32.totalorder %s18, 4
      // Predicated region
      $region25: #{timestep_embedder_forward.1} parent=5 // pred_check
        %p194 = pneg %p193
      $region26: #{timestep_embedder_forward.1} parent=5 // pred_check_branch
        %196 = sbr.rel (%p194) target = $region28
      $region27: #{timestep_embedder_forward.1} parent=5 // pred_region
        // Predicated region
        $region29: #{timestep_embedder_forward.1} parent=27 // pred_check
          %p197 = pneg %p101
        $region30: #{timestep_embedder_forward.1} parent=27 // pred_check_branch
          %199 = sbr.rel (%p197) target = $region32
        $region31: #{timestep_embedder_forward.1} parent=27 // pred_region
          %s200 = sand.u32 %s91, 1
          %s201 = scalar_lea.sflag [#allocation6], %s200
          %s202 = sand.u32 %s91, 1
          %s203 = smul.addr %s202, 512
          %s204 = scalar_lea.vmem [#allocation5], %s203
          %s206 = ssub.s32 8192, 8192
          %207 = vsyncadd %s201, %s206
          %s208 = smul.addr %s18, 128
          %s209 = scalar_lea.hbm %s3, %s208
          %s210 = sshll.u32 %s204, 4
          %s211 = int_to_ptr.vmem [resolvable:$true] %s210
          %216 = dma.hbm_to_vmem [thread:$0]  %s209, 8192, %s211, %s201, 512, 128, 8
        $region32: #{timestep_embedder_forward.1} parent=27 // pred_fallthru
          _
        // Predicated region
        $region33: #{timestep_embedder_forward.1} parent=27 // pred_check
          %p217 = pneg %p127
        $region34: #{timestep_embedder_forward.1} parent=27 // pred_check_branch
          %219 = sbr.rel (%p217) target = $region36
        $region35: #{timestep_embedder_forward.1} parent=27 // pred_region
          %p220 = scmp.lt.s32.totalorder %s18, 3
          %s221 = scalar_select %p220, %s18, 3
          %s222 = scalar_lea.vmem %s4, %s221
        $region36: #{timestep_embedder_forward.1} parent=27 // pred_fallthru
          _
      $region28: #{timestep_embedder_forward.1} parent=5 // pred_fallthru
        _
      %p223 = scmp.le.s32.totalorder 1, %s18
      %p224 = scmp.lt.s32.totalorder %s18, 5
      %p225 = pnand %p223, %p224
      %p226 = pneg %p225
      // Predicated region
      $region37: #{timestep_embedder_forward.1} parent=5 // pred_check
        _
      $region38: #{timestep_embedder_forward.1} parent=5 // pred_check_branch
        %228 = sbr.rel (%p225) target = $region40
      $region39: #{timestep_embedder_forward.1} parent=5 // pred_region
        %s229 = ssub.s32 %s18, 1
        // Predicated region
        $region41: #{timestep_embedder_forward.1} parent=39 // pred_check
          %p230 = pneg %p60
        $region42: #{timestep_embedder_forward.1} parent=39 // pred_check_branch
          %232 = sbr.rel (%p230) target = $region44
        $region43: #{timestep_embedder_forward.1} parent=39 // pred_region
          %233 = dma.done [#allocation3], 16384
        $region44: #{timestep_embedder_forward.1} parent=39 // pred_fallthru
          _
        %s234 = sand.u32 %s94, 1
        %s235 = scalar_lea.sflag [#allocation6], %s234
        %s236 = sand.u32 %s94, 1
        %s237 = smul.addr %s236, 512
        %s238 = scalar_lea.vmem [#allocation5], %s237
        // Predicated region
        $region45: #{timestep_embedder_forward.1} parent=39 // pred_check
          %p239 = pneg %p107
        $region46: #{timestep_embedder_forward.1} parent=39 // pred_check_branch
          %241 = sbr.rel (%p239) target = $region48
        $region47: #{timestep_embedder_forward.1} parent=39 // pred_region
          %242 = dma.done %s235, 8192
        $region48: #{timestep_embedder_forward.1} parent=39 // pred_fallthru
          _
        %p243 = pneg %p39
        %p244 = pneg %p36
        %p245 = pneg %p60
        %p246 = pneg %p57
        %p247 = pneg %p81
        %p248 = pneg %p78
        %s249 = sand.u32 %s94, 1
        %s250 = scalar_lea.sflag [#allocation6], %s249
        %s251 = sand.u32 %s94, 1
        %s252 = smul.addr %s251, 512
        %s253 = scalar_lea.vmem [#allocation5], %s252
        %p254 = pneg %p107
        %p255 = pneg %p104
        %p256 = scmp.lt.s32.totalorder %s23, 3
        %s257 = scalar_select %p256, %s23, 3
        %s258 = scalar_lea.vmem %s4, %s257
        %p259 = pneg %p133
        %p260 = pneg %p130
        %p261 = pneg %p159
        %p262 = pneg %p156
        %s263 = sand.u32 %s146, 1
        %s264 = scalar_lea.sflag [#allocation4], %s263
        %s265 = sand.u32 %s146, 1
        %s266 = smul.addr %s265, 8
        %s267 = scalar_lea.vmem [#allocation7], %s266
        %p268 = scmp.lt.s32.totalorder %s23, 3
        %s269 = scalar_select %p268, %s23, 3
        %s270 = scalar_lea.vmem %s4, %s269
        %v271 = vld [vmem:[%s0] sm:$0xff]
        %v272 = vlaneseq
        %v273 = vand.u32 %v272, 127
        %v274 = vcvt.s32.f32 %v273
        %v275 = vmul.f32 %v274, -0.071955785
        %v276 = vmul.f32 %v275, 1.442695
        %v277 = vpow.pop %v276
        %279 = vset.pattern.permute.xlu0 0
        %280 = vperm.xlu0 %279, %v271
        %v281 = vpop.permute.xlu0 %280
        %v283 = vmul.f32 %v281, %v277
        %v284 = vand.u32 2147483647, %v283
        %vm285 = vcmp.le.f32.partialorder %v284, 0.7853982
        %vm286 = vcmp.lt.s32.totalorder %v283, 0
        %v287 = vand.u32 %v283, 2139095040
        %v288 = vshrl.u32 %v287, 23
        %v289 = vsub.s32 %v288, 127
        %v290 = vand.u32 2147483647, %v283
        %v291 = vand.u32 %v290, 8388607
        %v292 = vor.u32 %v291, 8388608
        %v293 = vsub.s32 0, %v292
        %v294 = vadd.s32 %v289, 1
        %vm295 = vcmp.gt.s32.totalorder %v294, 0
        %v296 = vsel %vm295, %v294, 0
        %v297 = vshrl.u32 %v296, 5
        %v298 = vand.u32 %v296, 31
        %v299 = vsub.s32 32, %v298
        %v300 = vshrl.u32 683565275, %v299
        %v301 = vshll.u32 683565275, %v298
        %v302 = vshrl.u32 2475754826, %v299
        %v303 = vor.u32 %v301, %v302
        %v304 = vshll.u32 2475754826, %v298
        %v305 = vshrl.u32 2131351028, %v299
        %v306 = vor.u32 %v304, %v305
        %v307 = vshll.u32 2131351028, %v298
        %v308 = vshrl.u32 2102212464, %v299
        %v309 = vor.u32 %v307, %v308
        %v310 = vshll.u32 2102212464, %v298
        %v311 = vshrl.u32 920167782, %v299
        %v312 = vor.u32 %v310, %v311
        %v313 = vshll.u32 920167782, %v298
        %v314 = vshrl.u32 1326507024, %v299
        %v315 = vor.u32 %v313, %v314
        %vm316 = vcmp.lt.s32.totalorder %v297, 1
        %vm317 = vcmp.lt.s32.totalorder %v297, 2
        %vm318 = vcmp.lt.s32.totalorder %v297, 3
        %vm319 = vcmp.lt.s32.totalorder %v297, 4
        %v320 = vsel %vm316, %v300, %v303
        %v321 = vsel %vm319, %v309, 2102212464
        %v322 = vsel %vm318, %v306, %v321
        %v323 = vsel %vm317, %v320, %v322
        %v324 = vsel %vm316, %v303, %v306
        %v325 = vsel %vm319, %v312, 920167782
        %v326 = vsel %vm318, %v309, %v325
        %v327 = vsel %vm317, %v324, %v326
        %v328 = vsel %vm316, %v306, %v309
        %v329 = vsel %vm319, %v315, 1326507024
        %v330 = vsel %vm318, %v312, %v329
        %v331 = vsel %vm317, %v328, %v330
        %v332 = vshll.u32 %v292, 8
        %v333 = vmul.u32.u64.compose %v332, %v331
        %v334 = vextract.low.u32 %v333
        %v335 = vextract.high.u32 %v333
        %v336 = vmul.u32.u64.compose %v332, %v327
        %v337 = vextract.low.u32 %v336
        %v338 = vextract.high.u32 %v336
        %v339 = vmul.u32 %v332, %v323
        %v340 = vadd.s32 %v335, %v337
        %vm341 = vc.u32 %v335, %v337
        %v342 = vadd.s32 %v338, 1
        %v343 = vsel %vm341, %v342, %v338
        %v344 = vadd.s32 %v339, %v343
        %v345 = vadd.s32 %v344, 536870912
        %v346 = vshrl.u32 %v345, 30
        %v347 = vshll.u32 %v346, 30
        %v348 = vsub.s32 %v344, %v347
        %vm349 = vcmp.lt.s32.totalorder %v348, 0
        %v350 = vsub.s32 0, %v348
        %v351 = vsel %vm349, %v350, %v348
        %v352 = vclz %v351
        %v353 = vsub.s32 %v352, 2
        %vm354 = vcmp.gt.s32.totalorder 0, %v353
        %v355 = vsel %vm354, 0, %v353
        %v356 = vsub.s32 32, %v355
        %v357 = vshll.u32 %v348, %v355
        %v358 = vshrl.u32 %v340, %v356
        %v359 = vor.u32 %v357, %v358
        %v360 = vsub.s32 4294967266, %v355
        %v361 = vadd.s32 %v360, 127
        %v362 = vshll.u32 %v361, 23
        %v363 = vor.u32 4788187, %v362
        %v364 = vand.u32 2147483647, %v363
        %v366 = vcvt.s32.f32 %v359
        %v367 = vmul.f32 %v366, %v364
        %v368 = vxor.u32 %v367, 2147483648
        %v369 = vsel %vm286, %v368, %v367
        %v370 = vsub.s32 4, %v346
        %v371 = vsel %vm286, %v370, %v346
        %v372 = vsel %vm285, %v283, %v369
        %v373 = vsel %vm285, 0, %v371
        %v374 = vcosq.f32.pop %v372
        %v375 = vsinq.f32.pop %v372
        %vm376 = vweird.f32 %v283
        %v377 = vand.u32 %v373, 3
        %vm378 = vcmp.lt.s32.totalorder %v377, 2
        %vm379 = vcmp.eq.s32.totalorder %v377, 0
        %v380 = vxor.u32 %v375, 2147483648
        %v381 = vsel %vm379, %v374, %v380
        %vm382 = vcmp.eq.s32.totalorder %v377, 2
        %v383 = vxor.u32 %v374, 2147483648
        %v384 = vsel %vm382, %v383, %v375
        %v385 = vsel %vm378, %v381, %v384
        %v386 = vsel %vm376, nan, %v385
        %v387 = vand.u32 2147483647, %v283
        %vm388 = vcmp.le.f32.partialorder %v387, 0.7853982
        %vm389 = vcmp.lt.s32.totalorder %v283, 0
        %v390 = vand.u32 %v283, 2139095040
        %v391 = vshrl.u32 %v390, 23
        %v392 = vsub.s32 %v391, 127
        %v393 = vand.u32 2147483647, %v283
        %v394 = vand.u32 %v393, 8388607
        %v395 = vor.u32 %v394, 8388608
        %v396 = vsub.s32 0, %v395
        %v397 = vadd.s32 %v392, 1
        %vm398 = vcmp.gt.s32.totalorder %v397, 0
        %v399 = vsel %vm398, %v397, 0
        %v400 = vshrl.u32 %v399, 5
        %v401 = vand.u32 %v399, 31
        %v402 = vsub.s32 32, %v401
        %v403 = vshrl.u32 683565275, %v402
        %v404 = vshll.u32 683565275, %v401
        %v405 = vshrl.u32 2475754826, %v402
        %v406 = vor.u32 %v404, %v405
        %v407 = vshll.u32 2475754826, %v401
        %v408 = vshrl.u32 2131351028, %v402
        %v409 = vor.u32 %v407, %v408
        %v410 = vshll.u32 2131351028, %v401
        %v411 = vshrl.u32 2102212464, %v402
        %v412 = vor.u32 %v410, %v411
        %v413 = vshll.u32 2102212464, %v401
        %v414 = vshrl.u32 920167782, %v402
        %v415 = vor.u32 %v413, %v414
        %v416 = vshll.u32 920167782, %v401
        %v417 = vshrl.u32 1326507024, %v402
        %v418 = vor.u32 %v416, %v417
        %vm419 = vcmp.lt.s32.totalorder %v400, 1
        %vm420 = vcmp.lt.s32.totalorder %v400, 2
        %vm421 = vcmp.lt.s32.totalorder %v400, 3
        %vm422 = vcmp.lt.s32.totalorder %v400, 4
        %v423 = vsel %vm419, %v403, %v406
        %v424 = vsel %vm422, %v412, 2102212464
        %v425 = vsel %vm421, %v409, %v424
        %v426 = vsel %vm420, %v423, %v425
        %v427 = vsel %vm419, %v406, %v409
        %v428 = vsel %vm422, %v415, 920167782
        %v429 = vsel %vm421, %v412, %v428
        %v430 = vsel %vm420, %v427, %v429
        %v431 = vsel %vm419, %v409, %v412
        %v432 = vsel %vm422, %v418, 1326507024
        %v433 = vsel %vm421, %v415, %v432
        %v434 = vsel %vm420, %v431, %v433
        %v435 = vshll.u32 %v395, 8
        %v436 = vmul.u32.u64.compose %v435, %v434
        %v437 = vextract.low.u32 %v436
        %v438 = vextract.high.u32 %v436
        %v439 = vmul.u32.u64.compose %v435, %v430
        %v440 = vextract.low.u32 %v439
        %v441 = vextract.high.u32 %v439
        %v442 = vmul.u32 %v435, %v426
        %v443 = vadd.s32 %v438, %v440
        %vm444 = vc.u32 %v438, %v440
        %v445 = vadd.s32 %v441, 1
        %v446 = vsel %vm444, %v445, %v441
        %v447 = vadd.s32 %v442, %v446
        %v448 = vadd.s32 %v447, 536870912
        %v449 = vshrl.u32 %v448, 30
        %v450 = vshll.u32 %v449, 30
        %v451 = vsub.s32 %v447, %v450
        %vm452 = vcmp.lt.s32.totalorder %v451, 0
        %v453 = vsub.s32 0, %v451
        %v454 = vsel %vm452, %v453, %v451
        %v455 = vclz %v454
        %v456 = vsub.s32 %v455, 2
        %vm457 = vcmp.gt.s32.totalorder 0, %v456
        %v458 = vsel %vm457, 0, %v456
        %v459 = vsub.s32 32, %v458
        %v460 = vshll.u32 %v451, %v458
        %v461 = vshrl.u32 %v443, %v459
        %v462 = vor.u32 %v460, %v461
        %v463 = vsub.s32 4294967266, %v458
        %v464 = vadd.s32 %v463, 127
        %v465 = vshll.u32 %v464, 23
        %v466 = vor.u32 4788187, %v465
        %v467 = vand.u32 2147483647, %v466
        %v469 = vcvt.s32.f32 %v462
        %v470 = vmul.f32 %v469, %v467
        %v471 = vxor.u32 %v470, 2147483648
        %v472 = vsel %vm389, %v471, %v470
        %v473 = vsub.s32 4, %v449
        %v474 = vsel %vm389, %v473, %v449
        %v475 = vsel %vm388, %v283, %v472
        %v476 = vsel %vm388, 0, %v474
        %v477 = vcosq.f32.pop %v475
        %v478 = vsinq.f32.pop %v475
        %vm479 = vweird.f32 %v283
        %v480 = vadd.s32 %v476, 3
        %v481 = vand.u32 %v480, 3
        %vm482 = vcmp.lt.s32.totalorder %v481, 2
        %vm483 = vcmp.eq.s32.totalorder %v481, 0
        %v484 = vxor.u32 %v478, 2147483648
        %v485 = vsel %vm483, %v477, %v484
        %vm486 = vcmp.eq.s32.totalorder %v481, 2
        %v487 = vxor.u32 %v477, 2147483648
        %v488 = vsel %vm486, %v487, %v478
        %v489 = vsel %vm482, %v485, %v488
        %v490 = vsel %vm479, nan, %v489
        %v491 = vld [vmem:[#allocation2] sm:$0xff]
        %v492 = vld [vmem:[#allocation2 + $0x8] sm:$0xff]
        %v493 = vld [vmem:[#allocation2 + $0x10] sm:$0xff]
        %v494 = vld [vmem:[#allocation2 + $0x18] sm:$0xff]
        %v495 = vld [vmem:[#allocation2 + $0x20] sm:$0xff]
        %v496 = vld [vmem:[#allocation2 + $0x28] sm:$0xff]
        %v497 = vld [vmem:[#allocation2 + $0x30] sm:$0xff]
        %v498 = vld [vmem:[#allocation2 + $0x38] sm:$0xff]
        %v499 = vld [vmem:[#allocation2 + $0x40] sm:$0xff]
        %v500 = vld [vmem:[#allocation2 + $0x48] sm:$0xff]
        %v501 = vld [vmem:[#allocation2 + $0x50] sm:$0xff]
        %v502 = vld [vmem:[#allocation2 + $0x58] sm:$0xff]
        %v503 = vld [vmem:[#allocation2 + $0x60] sm:$0xff]
        %v504 = vld [vmem:[#allocation2 + $0x68] sm:$0xff]
        %v505 = vld [vmem:[#allocation2 + $0x70] sm:$0xff]
        %v506 = vld [vmem:[#allocation2 + $0x78] sm:$0xff]
        %v507 = vld [vmem:[#allocation2 + $0x80] sm:$0xff]
        %v508 = vld [vmem:[#allocation2 + $0x88] sm:$0xff]
        %v509 = vld [vmem:[#allocation2 + $0x90] sm:$0xff]
        %v510 = vld [vmem:[#allocation2 + $0x98] sm:$0xff]
        %v511 = vld [vmem:[#allocation2 + $0xa0] sm:$0xff]
        %v512 = vld [vmem:[#allocation2 + $0xa8] sm:$0xff]
        %v513 = vld [vmem:[#allocation2 + $0xb0] sm:$0xff]
        %v514 = vld [vmem:[#allocation2 + $0xb8] sm:$0xff]
        %v515 = vld [vmem:[#allocation2 + $0xc0] sm:$0xff]
        %v516 = vld [vmem:[#allocation2 + $0xc8] sm:$0xff]
        %v517 = vld [vmem:[#allocation2 + $0xd0] sm:$0xff]
        %v518 = vld [vmem:[#allocation2 + $0xd8] sm:$0xff]
        %v519 = vld [vmem:[#allocation2 + $0xe0] sm:$0xff]
        %v520 = vld [vmem:[#allocation2 + $0xe8] sm:$0xff]
        %v521 = vld [vmem:[#allocation2 + $0xf0] sm:$0xff]
        %v522 = vld [vmem:[#allocation2 + $0xf8] sm:$0xff]
        %v523 = vld [vmem:[#allocation2 + $0x100] sm:$0xff]
        %v524 = vld [vmem:[#allocation2 + $0x108] sm:$0xff]
        %v525 = vld [vmem:[#allocation2 + $0x110] sm:$0xff]
        %v526 = vld [vmem:[#allocation2 + $0x118] sm:$0xff]
        %v527 = vld [vmem:[#allocation2 + $0x120] sm:$0xff]
        %v528 = vld [vmem:[#allocation2 + $0x128] sm:$0xff]
        %v529 = vld [vmem:[#allocation2 + $0x130] sm:$0xff]
        %v530 = vld [vmem:[#allocation2 + $0x138] sm:$0xff]
        %v531 = vld [vmem:[#allocation2 + $0x140] sm:$0xff]
        %v532 = vld [vmem:[#allocation2 + $0x148] sm:$0xff]
        %v533 = vld [vmem:[#allocation2 + $0x150] sm:$0xff]
        %v534 = vld [vmem:[#allocation2 + $0x158] sm:$0xff]
        %v535 = vld [vmem:[#allocation2 + $0x160] sm:$0xff]
        %v536 = vld [vmem:[#allocation2 + $0x168] sm:$0xff]
        %v537 = vld [vmem:[#allocation2 + $0x170] sm:$0xff]
        %v538 = vld [vmem:[#allocation2 + $0x178] sm:$0xff]
        %v539 = vld [vmem:[#allocation2 + $0x180] sm:$0xff]
        %v540 = vld [vmem:[#allocation2 + $0x188] sm:$0xff]
        %v541 = vld [vmem:[#allocation2 + $0x190] sm:$0xff]
        %v542 = vld [vmem:[#allocation2 + $0x198] sm:$0xff]
        %v543 = vld [vmem:[#allocation2 + $0x1a0] sm:$0xff]
        %v544 = vld [vmem:[#allocation2 + $0x1a8] sm:$0xff]
        %v545 = vld [vmem:[#allocation2 + $0x1b0] sm:$0xff]
        %v546 = vld [vmem:[#allocation2 + $0x1b8] sm:$0xff]
        %v547 = vld [vmem:[#allocation2 + $0x1c0] sm:$0xff]
        %v548 = vld [vmem:[#allocation2 + $0x1c8] sm:$0xff]
        %v549 = vld [vmem:[#allocation2 + $0x1d0] sm:$0xff]
        %v550 = vld [vmem:[#allocation2 + $0x1d8] sm:$0xff]
        %v551 = vld [vmem:[#allocation2 + $0x1e0] sm:$0xff]
        %v552 = vld [vmem:[#allocation2 + $0x1e8] sm:$0xff]
        %v553 = vld [vmem:[#allocation2 + $0x1f0] sm:$0xff]
        %v554 = vld [vmem:[#allocation2 + $0x1f8] sm:$0xff]
        %v555 = vld [vmem:[#allocation2 + $0x200] sm:$0xff]
        %v556 = vld [vmem:[#allocation2 + $0x208] sm:$0xff]
        %v557 = vld [vmem:[#allocation2 + $0x210] sm:$0xff]
        %v558 = vld [vmem:[#allocation2 + $0x218] sm:$0xff]
        %v559 = vld [vmem:[#allocation2 + $0x220] sm:$0xff]
        %v560 = vld [vmem:[#allocation2 + $0x228] sm:$0xff]
        %v561 = vld [vmem:[#allocation2 + $0x230] sm:$0xff]
        %v562 = vld [vmem:[#allocation2 + $0x238] sm:$0xff]
        %v563 = vld [vmem:[#allocation2 + $0x240] sm:$0xff]
        %v564 = vld [vmem:[#allocation2 + $0x248] sm:$0xff]
        %v565 = vld [vmem:[#allocation2 + $0x250] sm:$0xff]
        %v566 = vld [vmem:[#allocation2 + $0x258] sm:$0xff]
        %v567 = vld [vmem:[#allocation2 + $0x260] sm:$0xff]
        %v568 = vld [vmem:[#allocation2 + $0x268] sm:$0xff]
        %v569 = vld [vmem:[#allocation2 + $0x270] sm:$0xff]
        %v570 = vld [vmem:[#allocation2 + $0x278] sm:$0xff]
        %v571 = vld [vmem:[#allocation2 + $0x280] sm:$0xff]
        %v572 = vld [vmem:[#allocation2 + $0x288] sm:$0xff]
        %v573 = vld [vmem:[#allocation2 + $0x290] sm:$0xff]
        %v574 = vld [vmem:[#allocation2 + $0x298] sm:$0xff]
        %v575 = vld [vmem:[#allocation2 + $0x2a0] sm:$0xff]
        %v576 = vld [vmem:[#allocation2 + $0x2a8] sm:$0xff]
        %v577 = vld [vmem:[#allocation2 + $0x2b0] sm:$0xff]
        %v578 = vld [vmem:[#allocation2 + $0x2b8] sm:$0xff]
        %v579 = vld [vmem:[#allocation2 + $0x2c0] sm:$0xff]
        %v580 = vld [vmem:[#allocation2 + $0x2c8] sm:$0xff]
        %v581 = vld [vmem:[#allocation2 + $0x2d0] sm:$0xff]
        %v582 = vld [vmem:[#allocation2 + $0x2d8] sm:$0xff]
        %v583 = vld [vmem:[#allocation2 + $0x2e0] sm:$0xff]
        %v584 = vld [vmem:[#allocation2 + $0x2e8] sm:$0xff]
        %v585 = vld [vmem:[#allocation2 + $0x2f0] sm:$0xff]
        %v586 = vld [vmem:[#allocation2 + $0x2f8] sm:$0xff]
        %v587 = vld [vmem:[#allocation2 + $0x300] sm:$0xff]
        %v588 = vld [vmem:[#allocation2 + $0x308] sm:$0xff]
        %v589 = vld [vmem:[#allocation2 + $0x310] sm:$0xff]
        %v590 = vld [vmem:[#allocation2 + $0x318] sm:$0xff]
        %v591 = vld [vmem:[#allocation2 + $0x320] sm:$0xff]
        %v592 = vld [vmem:[#allocation2 + $0x328] sm:$0xff]
        %v593 = vld [vmem:[#allocation2 + $0x330] sm:$0xff]
        %v594 = vld [vmem:[#allocation2 + $0x338] sm:$0xff]
        %v595 = vld [vmem:[#allocation2 + $0x340] sm:$0xff]
        %v596 = vld [vmem:[#allocation2 + $0x348] sm:$0xff]
        %v597 = vld [vmem:[#allocation2 + $0x350] sm:$0xff]
        %v598 = vld [vmem:[#allocation2 + $0x358] sm:$0xff]
        %v599 = vld [vmem:[#allocation2 + $0x360] sm:$0xff]
        %v600 = vld [vmem:[#allocation2 + $0x368] sm:$0xff]
        %v601 = vld [vmem:[#allocation2 + $0x370] sm:$0xff]
        %v602 = vld [vmem:[#allocation2 + $0x378] sm:$0xff]
        %v603 = vld [vmem:[#allocation2 + $0x380] sm:$0xff]
        %v604 = vld [vmem:[#allocation2 + $0x388] sm:$0xff]
        %v605 = vld [vmem:[#allocation2 + $0x390] sm:$0xff]
        %v606 = vld [vmem:[#allocation2 + $0x398] sm:$0xff]
        %v607 = vld [vmem:[#allocation2 + $0x3a0] sm:$0xff]
        %v608 = vld [vmem:[#allocation2 + $0x3a8] sm:$0xff]
        %v609 = vld [vmem:[#allocation2 + $0x3b0] sm:$0xff]
        %v610 = vld [vmem:[#allocation2 + $0x3b8] sm:$0xff]
        %v611 = vld [vmem:[#allocation2 + $0x3c0] sm:$0xff]
        %v612 = vld [vmem:[#allocation2 + $0x3c8] sm:$0xff]
        %v613 = vld [vmem:[#allocation2 + $0x3d0] sm:$0xff]
        %v614 = vld [vmem:[#allocation2 + $0x3d8] sm:$0xff]
        %v615 = vld [vmem:[#allocation2 + $0x3e0] sm:$0xff]
        %v616 = vld [vmem:[#allocation2 + $0x3e8] sm:$0xff]
        %v617 = vld [vmem:[#allocation2 + $0x3f0] sm:$0xff]
        %v618 = vld [vmem:[#allocation2 + $0x3f8] sm:$0xff]
        %619 = vmatprep.subr.mxu0 %v616
        %620 = vmatpush1.msra.mxu0 %v615
        %621 = vmatprep.subr.mxu0 %v612
        %622 = vmatpush1.msra.mxu0 %v611
        %623 = vmatprep.subr.mxu0 %v608
        %624 = vmatpush1.msra.mxu0 %v607
        %625 = vmatprep.subr.mxu0 %v604
        %626 = vmatpush1.msra.mxu0 %v603
        %627 = vmatprep.subr.mxu0 %v600
        %628 = vmatpush1.msra.mxu0 %v599
        %629 = vmatprep.subr.mxu0 %v596
        %630 = vmatpush1.msra.mxu0 %v595
        %631 = vmatprep.subr.mxu0 %v592
        %632 = vmatpush1.msra.mxu0 %v591
        %633 = vmatprep.subr.mxu0 %v588
        %634 = vmatpush1.msra.mxu0 %v587
        %635 = vmatprep.subr.mxu0 %v584
        %636 = vmatpush1.msra.mxu0 %v583
        %637 = vmatprep.subr.mxu0 %v580
        %638 = vmatpush1.msra.mxu0 %v579
        %639 = vmatprep.subr.mxu0 %v576
        %640 = vmatpush1.msra.mxu0 %v575
        %641 = vmatprep.subr.mxu0 %v572
        %642 = vmatpush1.msra.mxu0 %v571
        %643 = vmatprep.subr.mxu0 %v568
        %644 = vmatpush1.msra.mxu0 %v567
        %645 = vmatprep.subr.mxu0 %v564
        %646 = vmatpush1.msra.mxu0 %v563
        %647 = vmatprep.subr.mxu0 %v560
        %648 = vmatpush1.msra.mxu0 %v559
        %649 = vmatprep.subr.mxu0 %v556
        %650 = vmatpush1.msra.mxu0 %v555
        %651 = vmatprep.subr.mxu0 0.0
        %652 = vmatpush2.msra.mxu0 0.0
        %653 = vmatprep.subr.mxu0 0.0
        %654 = vmatpush2.msra.mxu0 0.0
        %655 = vmatprep.subr.mxu0 0.0
        %656 = vmatpush2.msra.mxu0 0.0
        %657 = vmatprep.subr.mxu0 0.0
        %658 = vmatpush2.msra.mxu0 0.0
        %659 = vmatprep.subr.mxu0 0.0
        %660 = vmatpush2.msra.mxu0 0.0
        %661 = vmatprep.subr.mxu0 0.0
        %662 = vmatpush2.msra.mxu0 0.0
        %663 = vmatprep.subr.mxu0 0.0
        %664 = vmatpush2.msra.mxu0 0.0
        %665 = vmatprep.subr.mxu0 0.0
        %666 = vmatpush2.msra.mxu0 0.0
        %667 = vmatprep.subr.mxu0 0.0
        %668 = vmatpush2.msra.mxu0 0.0
        %669 = vmatprep.subr.mxu0 0.0
        %670 = vmatpush2.msra.mxu0 0.0
        %671 = vmatprep.subr.mxu0 0.0
        %672 = vmatpush2.msra.mxu0 0.0
        %673 = vmatprep.subr.mxu0 0.0
        %674 = vmatpush2.msra.mxu0 0.0
        %675 = vmatprep.subr.mxu0 0.0
        %676 = vmatpush2.msra.mxu0 0.0
        %677 = vmatprep.subr.mxu0 0.0
        %678 = vmatpush2.msra.mxu0 0.0
        %679 = vmatprep.subr.mxu0 0.0
        %680 = vmatpush2.msra.mxu0 0.0
        %681 = vmatprep.subr.mxu0 0.0
        %682 = vmatpush2.msra.mxu0 0.0
        %683 = vmatprep.mubr.f32.mxu0 0.0
        %684 = vmatmul.mubr.f32.gmra.mxu0 %v490
        %v685 = vpop.f32.mrf.mxu0
        %v686 = vadd.f32 0.0, %v685
        %v687 = vpop.f32.mrf.mxu0
        %v688 = vadd.f32 0.0, %v687
        %689 = vdwg.mxu0
        %690 = vmatprep.subr.mxu0 %v618
        %691 = vmatpush1.msra.mxu0 %v617
        %692 = vmatprep.subr.mxu0 %v614
        %693 = vmatpush1.msra.mxu0 %v613
        %694 = vmatprep.subr.mxu0 %v610
        %695 = vmatpush1.msra.mxu0 %v609
        %696 = vmatprep.subr.mxu0 %v606
        %697 = vmatpush1.msra.mxu0 %v605
        %698 = vmatprep.subr.mxu0 %v602
        %699 = vmatpush1.msra.mxu0 %v601
        %700 = vmatprep.subr.mxu0 %v598
        %701 = vmatpush1.msra.mxu0 %v597
        %702 = vmatprep.subr.mxu0 %v594
        %703 = vmatpush1.msra.mxu0 %v593
        %704 = vmatprep.subr.mxu0 %v590
        %705 = vmatpush1.msra.mxu0 %v589
        %706 = vmatprep.subr.mxu0 %v586
        %707 = vmatpush1.msra.mxu0 %v585
        %708 = vmatprep.subr.mxu0 %v582
        %709 = vmatpush1.msra.mxu0 %v581
        %710 = vmatprep.subr.mxu0 %v578
        %711 = vmatpush1.msra.mxu0 %v577
        %712 = vmatprep.subr.mxu0 %v574
        %713 = vmatpush1.msra.mxu0 %v573
        %714 = vmatprep.subr.mxu0 %v570
        %715 = vmatpush1.msra.mxu0 %v569
        %716 = vmatprep.subr.mxu0 %v566
        %717 = vmatpush1.msra.mxu0 %v565
        %718 = vmatprep.subr.mxu0 %v562
        %719 = vmatpush1.msra.mxu0 %v561
        %720 = vmatprep.subr.mxu0 %v558
        %721 = vmatpush1.msra.mxu0 %v557
        %722 = vmatprep.subr.mxu0 0.0
        %723 = vmatpush2.msra.mxu0 0.0
        %724 = vmatprep.subr.mxu0 0.0
        %725 = vmatpush2.msra.mxu0 0.0
        %726 = vmatprep.subr.mxu0 0.0
        %727 = vmatpush2.msra.mxu0 0.0
        %728 = vmatprep.subr.mxu0 0.0
        %729 = vmatpush2.msra.mxu0 0.0
        %730 = vmatprep.subr.mxu0 0.0
        %731 = vmatpush2.msra.mxu0 0.0
        %732 = vmatprep.subr.mxu0 0.0
        %733 = vmatpush2.msra.mxu0 0.0
        %734 = vmatprep.subr.mxu0 0.0
        %735 = vmatpush2.msra.mxu0 0.0
        %736 = vmatprep.subr.mxu0 0.0
        %737 = vmatpush2.msra.mxu0 0.0
        %738 = vmatprep.subr.mxu0 0.0
        %739 = vmatpush2.msra.mxu0 0.0
        %740 = vmatprep.subr.mxu0 0.0
        %741 = vmatpush2.msra.mxu0 0.0
        %742 = vmatprep.subr.mxu0 0.0
        %743 = vmatpush2.msra.mxu0 0.0
        %744 = vmatprep.subr.mxu0 0.0
        %745 = vmatpush2.msra.mxu0 0.0
        %746 = vmatprep.subr.mxu0 0.0
        %747 = vmatpush2.msra.mxu0 0.0
        %748 = vmatprep.subr.mxu0 0.0
        %749 = vmatpush2.msra.mxu0 0.0
        %750 = vmatprep.subr.mxu0 0.0
        %751 = vmatpush2.msra.mxu0 0.0
        %752 = vmatprep.subr.mxu0 0.0
        %753 = vmatpush2.msra.mxu0 0.0
        %754 = vmatprep.mubr.f32.mxu0 0.0
        %755 = vmatmul.mubr.f32.gmra.mxu0 %v490
        %v756 = vpop.f32.mrf.mxu0
        %v757 = vadd.f32 0.0, %v756
        %v758 = vpop.f32.mrf.mxu0
        %v759 = vadd.f32 0.0, %v758
        %760 = vdwg.mxu0
        %761 = vmatprep.subr.mxu0 %v552
        %762 = vmatpush1.msra.mxu0 %v551
        %763 = vmatprep.subr.mxu0 %v548
        %764 = vmatpush1.msra.mxu0 %v547
        %765 = vmatprep.subr.mxu0 %v544
        %766 = vmatpush1.msra.mxu0 %v543
        %767 = vmatprep.subr.mxu0 %v540
        %768 = vmatpush1.msra.mxu0 %v539
        %769 = vmatprep.subr.mxu0 %v536
        %770 = vmatpush1.msra.mxu0 %v535
        %771 = vmatprep.subr.mxu0 %v532
        %772 = vmatpush1.msra.mxu0 %v531
        %773 = vmatprep.subr.mxu0 %v528
        %774 = vmatpush1.msra.mxu0 %v527
        %775 = vmatprep.subr.mxu0 %v524
        %776 = vmatpush1.msra.mxu0 %v523
        %777 = vmatprep.subr.mxu0 %v520
        %778 = vmatpush1.msra.mxu0 %v519
        %779 = vmatprep.subr.mxu0 %v516
        %780 = vmatpush1.msra.mxu0 %v515
        %781 = vmatprep.subr.mxu0 %v512
        %782 = vmatpush1.msra.mxu0 %v511
        %783 = vmatprep.subr.mxu0 %v508
        %784 = vmatpush1.msra.mxu0 %v507
        %785 = vmatprep.subr.mxu0 %v504
        %786 = vmatpush1.msra.mxu0 %v503
        %787 = vmatprep.subr.mxu0 %v500
        %788 = vmatpush1.msra.mxu0 %v499
        %789 = vmatprep.subr.mxu0 %v496
        %790 = vmatpush1.msra.mxu0 %v495
        %791 = vmatprep.subr.mxu0 %v492
        %792 = vmatpush1.msra.mxu0 %v491
        %793 = vmatprep.subr.mxu0 0.0
        %794 = vmatpush2.msra.mxu0 0.0
        %795 = vmatprep.subr.mxu0 0.0
        %796 = vmatpush2.msra.mxu0 0.0
        %797 = vmatprep.subr.mxu0 0.0
        %798 = vmatpush2.msra.mxu0 0.0
        %799 = vmatprep.subr.mxu0 0.0
        %800 = vmatpush2.msra.mxu0 0.0
        %801 = vmatprep.subr.mxu0 0.0
        %802 = vmatpush2.msra.mxu0 0.0
        %803 = vmatprep.subr.mxu0 0.0
        %804 = vmatpush2.msra.mxu0 0.0
        %805 = vmatprep.subr.mxu0 0.0
        %806 = vmatpush2.msra.mxu0 0.0
        %807 = vmatprep.subr.mxu0 0.0
        %808 = vmatpush2.msra.mxu0 0.0
        %809 = vmatprep.subr.mxu0 0.0
        %810 = vmatpush2.msra.mxu0 0.0
        %811 = vmatprep.subr.mxu0 0.0
        %812 = vmatpush2.msra.mxu0 0.0
        %813 = vmatprep.subr.mxu0 0.0
        %814 = vmatpush2.msra.mxu0 0.0
        %815 = vmatprep.subr.mxu0 0.0
        %816 = vmatpush2.msra.mxu0 0.0
        %817 = vmatprep.subr.mxu0 0.0
        %818 = vmatpush2.msra.mxu0 0.0
        %819 = vmatprep.subr.mxu0 0.0
        %820 = vmatpush2.msra.mxu0 0.0
        %821 = vmatprep.subr.mxu0 0.0
        %822 = vmatpush2.msra.mxu0 0.0
        %823 = vmatprep.subr.mxu0 0.0
        %824 = vmatpush2.msra.mxu0 0.0
        %825 = vmatprep.mubr.f32.mxu0 0.0
        %826 = vmatmul.mubr.f32.gmra.mxu0 %v386
        %v827 = vpop.f32.mrf.mxu0
        %v828 = vadd.f32 %v686, %v827
        %v829 = vpop.f32.mrf.mxu0
        %v830 = vadd.f32 %v688, %v829
        %831 = vdwg.mxu0
        %832 = vmatprep.subr.mxu0 %v554
        %833 = vmatpush1.msra.mxu0 %v553
        %834 = vmatprep.subr.mxu0 %v550
        %835 = vmatpush1.msra.mxu0 %v549
        %836 = vmatprep.subr.mxu0 %v546
        %837 = vmatpush1.msra.mxu0 %v545
        %838 = vmatprep.subr.mxu0 %v542
        %839 = vmatpush1.msra.mxu0 %v541
        %840 = vmatprep.subr.mxu0 %v538
        %841 = vmatpush1.msra.mxu0 %v537
        %842 = vmatprep.subr.mxu0 %v534
        %843 = vmatpush1.msra.mxu0 %v533
        %844 = vmatprep.subr.mxu0 %v530
        %845 = vmatpush1.msra.mxu0 %v529
        %846 = vmatprep.subr.mxu0 %v526
        %847 = vmatpush1.msra.mxu0 %v525
        %848 = vmatprep.subr.mxu0 %v522
        %849 = vmatpush1.msra.mxu0 %v521
        %850 = vmatprep.subr.mxu0 %v518
        %851 = vmatpush1.msra.mxu0 %v517
        %852 = vmatprep.subr.mxu0 %v514
        %853 = vmatpush1.msra.mxu0 %v513
        %854 = vmatprep.subr.mxu0 %v510
        %855 = vmatpush1.msra.mxu0 %v509
        %856 = vmatprep.subr.mxu0 %v506
        %857 = vmatpush1.msra.mxu0 %v505
        %858 = vmatprep.subr.mxu0 %v502
        %859 = vmatpush1.msra.mxu0 %v501
        %860 = vmatprep.subr.mxu0 %v498
        %861 = vmatpush1.msra.mxu0 %v497
        %862 = vmatprep.subr.mxu0 %v494
        %863 = vmatpush1.msra.mxu0 %v493
        %864 = vmatprep.subr.mxu0 0.0
        %865 = vmatpush2.msra.mxu0 0.0
        %866 = vmatprep.subr.mxu0 0.0
        %867 = vmatpush2.msra.mxu0 0.0
        %868 = vmatprep.subr.mxu0 0.0
        %869 = vmatpush2.msra.mxu0 0.0
        %870 = vmatprep.subr.mxu0 0.0
        %871 = vmatpush2.msra.mxu0 0.0
        %872 = vmatprep.subr.mxu0 0.0
        %873 = vmatpush2.msra.mxu0 0.0
        %874 = vmatprep.subr.mxu0 0.0
        %875 = vmatpush2.msra.mxu0 0.0
        %876 = vmatprep.subr.mxu0 0.0
        %877 = vmatpush2.msra.mxu0 0.0
        %878 = vmatprep.subr.mxu0 0.0
        %879 = vmatpush2.msra.mxu0 0.0
        %880 = vmatprep.subr.mxu0 0.0
        %881 = vmatpush2.msra.mxu0 0.0
        %882 = vmatprep.subr.mxu0 0.0
        %883 = vmatpush2.msra.mxu0 0.0
        %884 = vmatprep.subr.mxu0 0.0
        %885 = vmatpush2.msra.mxu0 0.0
        %886 = vmatprep.subr.mxu0 0.0
        %887 = vmatpush2.msra.mxu0 0.0
        %888 = vmatprep.subr.mxu0 0.0
        %889 = vmatpush2.msra.mxu0 0.0
        %890 = vmatprep.subr.mxu0 0.0
        %891 = vmatpush2.msra.mxu0 0.0
        %892 = vmatprep.subr.mxu0 0.0
        %893 = vmatpush2.msra.mxu0 0.0
        %894 = vmatprep.subr.mxu0 0.0
        %895 = vmatpush2.msra.mxu0 0.0
        %896 = vmatprep.mubr.f32.mxu0 0.0
        %897 = vmatmul.mubr.f32.gmra.mxu0 %v386
        %v898 = vpop.f32.mrf.mxu0
        %v899 = vadd.f32 %v757, %v898
        %v900 = vpop.f32.mrf.mxu0
        %v901 = vadd.f32 %v759, %v900
        %902 = vdwg.mxu0
        %v903 = vld [vmem:[%s2] sm:$0xf]
        %v905 = vlaneseq
        %v906 = vshrl.u32 %v905, 7
        %v907 = vsub.s32 0, %v906
        %v908 = vrot.slane %v903, %v907
        %v909 = vlaneseq
        %v910 = vshrl.u32 %v909, 7
        %v911 = vsub.s32 1, %v910
        %v912 = vrot.slane %v903, %v911
        %v913 = vlaneseq
        %v914 = vshrl.u32 %v913, 7
        %v915 = vsub.s32 2, %v914
        %v916 = vrot.slane %v903, %v915
        %v917 = vlaneseq
        %v918 = vshrl.u32 %v917, 7
        %v919 = vsub.s32 3, %v918
        %v920 = vrot.slane %v903, %v919
        %v925 = vadd.f32 %v828, %v908
        %v926 = vadd.f32 %v830, %v912
        %v927 = vadd.f32 %v899, %v916
        %v928 = vadd.f32 %v901, %v920
        %v929 = vxor.u32 %v925, 2147483648
        %v930 = vxor.u32 %v926, 2147483648
        %v931 = vxor.u32 %v927, 2147483648
        %v932 = vxor.u32 %v928, 2147483648
        %v933 = vmul.f32 %v929, 1.442695
        %v934 = vpow.pop %v933
        %v935 = vmul.f32 %v930, 1.442695
        %v936 = vpow.pop %v935
        %v937 = vmul.f32 %v931, 1.442695
        %v938 = vpow.pop %v937
        %v939 = vmul.f32 %v932, 1.442695
        %v940 = vpow.pop %v939
        %v941 = vadd.f32 %v934, 1.0
        %v942 = vadd.f32 %v936, 1.0
        %v943 = vadd.f32 %v938, 1.0
        %v944 = vadd.f32 %v940, 1.0
        %v945 = vrcp.pop %v941
        %v946 = vmul.f32 1.0, %v945
        %v947 = vrcp.pop %v942
        %v948 = vmul.f32 1.0, %v947
        %v949 = vrcp.pop %v943
        %v950 = vmul.f32 1.0, %v949
        %v951 = vrcp.pop %v944
        %v952 = vmul.f32 1.0, %v951
        %v953 = vmul.f32 %v925, %v946
        %v954 = vmul.f32 %v926, %v948
        %v955 = vmul.f32 %v927, %v950
        %v956 = vmul.f32 %v928, %v952
        %v957 = vld [vmem:[%s238] sm:$0xff]
        %v958 = vld [vmem:[%s238 + $0x8] sm:$0xff]
        %v959 = vld [vmem:[%s238 + $0x10] sm:$0xff]
        %v960 = vld [vmem:[%s238 + $0x18] sm:$0xff]
        %v961 = vld [vmem:[%s238 + $0x20] sm:$0xff]
        %v962 = vld [vmem:[%s238 + $0x28] sm:$0xff]
        %v963 = vld [vmem:[%s238 + $0x30] sm:$0xff]
        %v964 = vld [vmem:[%s238 + $0x38] sm:$0xff]
        %v965 = vld [vmem:[%s238 + $0x40] sm:$0xff]
        %v966 = vld [vmem:[%s238 + $0x48] sm:$0xff]
        %v967 = vld [vmem:[%s238 + $0x50] sm:$0xff]
        %v968 = vld [vmem:[%s238 + $0x58] sm:$0xff]
        %v969 = vld [vmem:[%s238 + $0x60] sm:$0xff]
        %v970 = vld [vmem:[%s238 + $0x68] sm:$0xff]
        %v971 = vld [vmem:[%s238 + $0x70] sm:$0xff]
        %v972 = vld [vmem:[%s238 + $0x78] sm:$0xff]
        %v973 = vld [vmem:[%s238 + $0x80] sm:$0xff]
        %v974 = vld [vmem:[%s238 + $0x88] sm:$0xff]
        %v975 = vld [vmem:[%s238 + $0x90] sm:$0xff]
        %v976 = vld [vmem:[%s238 + $0x98] sm:$0xff]
        %v977 = vld [vmem:[%s238 + $0xa0] sm:$0xff]
        %v978 = vld [vmem:[%s238 + $0xa8] sm:$0xff]
        %v979 = vld [vmem:[%s238 + $0xb0] sm:$0xff]
        %v980 = vld [vmem:[%s238 + $0xb8] sm:$0xff]
        %v981 = vld [vmem:[%s238 + $0xc0] sm:$0xff]
        %v982 = vld [vmem:[%s238 + $0xc8] sm:$0xff]
        %v983 = vld [vmem:[%s238 + $0xd0] sm:$0xff]
        %v984 = vld [vmem:[%s238 + $0xd8] sm:$0xff]
        %v985 = vld [vmem:[%s238 + $0xe0] sm:$0xff]
        %v986 = vld [vmem:[%s238 + $0xe8] sm:$0xff]
        %v987 = vld [vmem:[%s238 + $0xf0] sm:$0xff]
        %v988 = vld [vmem:[%s238 + $0xf8] sm:$0xff]
        %v989 = vld [vmem:[%s238 + $0x100] sm:$0xff]
        %v990 = vld [vmem:[%s238 + $0x108] sm:$0xff]
        %v991 = vld [vmem:[%s238 + $0x110] sm:$0xff]
        %v992 = vld [vmem:[%s238 + $0x118] sm:$0xff]
        %v993 = vld [vmem:[%s238 + $0x120] sm:$0xff]
        %v994 = vld [vmem:[%s238 + $0x128] sm:$0xff]
        %v995 = vld [vmem:[%s238 + $0x130] sm:$0xff]
        %v996 = vld [vmem:[%s238 + $0x138] sm:$0xff]
        %v997 = vld [vmem:[%s238 + $0x140] sm:$0xff]
        %v998 = vld [vmem:[%s238 + $0x148] sm:$0xff]
        %v999 = vld [vmem:[%s238 + $0x150] sm:$0xff]
        %v1000 = vld [vmem:[%s238 + $0x158] sm:$0xff]
        %v1001 = vld [vmem:[%s238 + $0x160] sm:$0xff]
        %v1002 = vld [vmem:[%s238 + $0x168] sm:$0xff]
        %v1003 = vld [vmem:[%s238 + $0x170] sm:$0xff]
        %v1004 = vld [vmem:[%s238 + $0x178] sm:$0xff]
        %v1005 = vld [vmem:[%s238 + $0x180] sm:$0xff]
        %v1006 = vld [vmem:[%s238 + $0x188] sm:$0xff]
        %v1007 = vld [vmem:[%s238 + $0x190] sm:$0xff]
        %v1008 = vld [vmem:[%s238 + $0x198] sm:$0xff]
        %v1009 = vld [vmem:[%s238 + $0x1a0] sm:$0xff]
        %v1010 = vld [vmem:[%s238 + $0x1a8] sm:$0xff]
        %v1011 = vld [vmem:[%s238 + $0x1b0] sm:$0xff]
        %v1012 = vld [vmem:[%s238 + $0x1b8] sm:$0xff]
        %v1013 = vld [vmem:[%s238 + $0x1c0] sm:$0xff]
        %v1014 = vld [vmem:[%s238 + $0x1c8] sm:$0xff]
        %v1015 = vld [vmem:[%s238 + $0x1d0] sm:$0xff]
        %v1016 = vld [vmem:[%s238 + $0x1d8] sm:$0xff]
        %v1017 = vld [vmem:[%s238 + $0x1e0] sm:$0xff]
        %v1018 = vld [vmem:[%s238 + $0x1e8] sm:$0xff]
        %v1019 = vld [vmem:[%s238 + $0x1f0] sm:$0xff]
        %v1020 = vld [vmem:[%s238 + $0x1f8] sm:$0xff]
        %v1021 = vld [vmem:[%s270] sm:$0x1]
        %v1023 = vlaneseq
        %v1024 = vshrl.u32 %v1023, 7
        %v1025 = vsub.s32 0, %v1024
        %v1026 = vrot.slane %v1021, %v1025
        %1028 = vmatprep.subr.mxu0 0.0
        %1029 = vmatpush1.msra.mxu0 %v972
        %1030 = vmatprep.subr.mxu0 0.0
        %1031 = vmatpush1.msra.mxu0 %v971
        %1032 = vmatprep.subr.mxu0 0.0
        %1033 = vmatpush1.msra.mxu0 %v970
        %1034 = vmatprep.subr.mxu0 0.0
        %1035 = vmatpush1.msra.mxu0 %v969
        %1036 = vmatprep.subr.mxu0 0.0
        %1037 = vmatpush1.msra.mxu0 %v968
        %1038 = vmatprep.subr.mxu0 0.0
        %1039 = vmatpush1.msra.mxu0 %v967
        %1040 = vmatprep.subr.mxu0 0.0
        %1041 = vmatpush1.msra.mxu0 %v966
        %1042 = vmatprep.subr.mxu0 0.0
        %1043 = vmatpush1.msra.mxu0 %v965
        %1044 = vmatprep.subr.mxu0 0.0
        %1045 = vmatpush1.msra.mxu0 %v964
        %1046 = vmatprep.subr.mxu0 0.0
        %1047 = vmatpush1.msra.mxu0 %v963
        %1048 = vmatprep.subr.mxu0 0.0
        %1049 = vmatpush1.msra.mxu0 %v962
        %1050 = vmatprep.subr.mxu0 0.0
        %1051 = vmatpush1.msra.mxu0 %v961
        %1052 = vmatprep.subr.mxu0 0.0
        %1053 = vmatpush1.msra.mxu0 %v960
        %1054 = vmatprep.subr.mxu0 0.0
        %1055 = vmatpush1.msra.mxu0 %v959
        %1056 = vmatprep.subr.mxu0 0.0
        %1057 = vmatpush1.msra.mxu0 %v958
        %1058 = vmatprep.subr.mxu0 0.0
        %1059 = vmatpush1.msra.mxu0 %v957
        %1060 = vmatprep.subr.mxu0 0.0
        %1061 = vmatpush2.msra.mxu0 %v988
        %1062 = vmatprep.subr.mxu0 0.0
        %1063 = vmatpush2.msra.mxu0 %v987
        %1064 = vmatprep.subr.mxu0 0.0
        %1065 = vmatpush2.msra.mxu0 %v986
        %1066 = vmatprep.subr.mxu0 0.0
        %1067 = vmatpush2.msra.mxu0 %v985
        %1068 = vmatprep.subr.mxu0 0.0
        %1069 = vmatpush2.msra.mxu0 %v984
        %1070 = vmatprep.subr.mxu0 0.0
        %1071 = vmatpush2.msra.mxu0 %v983
        %1072 = vmatprep.subr.mxu0 0.0
        %1073 = vmatpush2.msra.mxu0 %v982
        %1074 = vmatprep.subr.mxu0 0.0
        %1075 = vmatpush2.msra.mxu0 %v981
        %1076 = vmatprep.subr.mxu0 0.0
        %1077 = vmatpush2.msra.mxu0 %v980
        %1078 = vmatprep.subr.mxu0 0.0
        %1079 = vmatpush2.msra.mxu0 %v979
        %1080 = vmatprep.subr.mxu0 0.0
        %1081 = vmatpush2.msra.mxu0 %v978
        %1082 = vmatprep.subr.mxu0 0.0
        %1083 = vmatpush2.msra.mxu0 %v977
        %1084 = vmatprep.subr.mxu0 0.0
        %1085 = vmatpush2.msra.mxu0 %v976
        %1086 = vmatprep.subr.mxu0 0.0
        %1087 = vmatpush2.msra.mxu0 %v975
        %1088 = vmatprep.subr.mxu0 0.0
        %1089 = vmatpush2.msra.mxu0 %v974
        %1090 = vmatprep.subr.mxu0 0.0
        %1091 = vmatpush2.msra.mxu0 %v973
        %1092 = vmatprep.mubr.f32.mxu0 %v954
        %1093 = vmatmul.mubr.f32.gmra.mxu0 %v953
        %v1094 = vpop.f32.mrf.mxu0
        %v1095 = vadd.f32 %v1026, %v1094
        %v1096 = vpop.f32.mrf.mxu0
        %1097 = vdwg.mxu0
        %1098 = vmatprep.subr.mxu0 0.0
        %1099 = vmatpush1.msra.mxu0 %v1004
        %1100 = vmatprep.subr.mxu0 0.0
        %1101 = vmatpush1.msra.mxu0 %v1003
        %1102 = vmatprep.subr.mxu0 0.0
        %1103 = vmatpush1.msra.mxu0 %v1002
        %1104 = vmatprep.subr.mxu0 0.0
        %1105 = vmatpush1.msra.mxu0 %v1001
        %1106 = vmatprep.subr.mxu0 0.0
        %1107 = vmatpush1.msra.mxu0 %v1000
        %1108 = vmatprep.subr.mxu0 0.0
        %1109 = vmatpush1.msra.mxu0 %v999
        %1110 = vmatprep.subr.mxu0 0.0
        %1111 = vmatpush1.msra.mxu0 %v998
        %1112 = vmatprep.subr.mxu0 0.0
        %1113 = vmatpush1.msra.mxu0 %v997
        %1114 = vmatprep.subr.mxu0 0.0
        %1115 = vmatpush1.msra.mxu0 %v996
        %1116 = vmatprep.subr.mxu0 0.0
        %1117 = vmatpush1.msra.mxu0 %v995
        %1118 = vmatprep.subr.mxu0 0.0
        %1119 = vmatpush1.msra.mxu0 %v994
        %1120 = vmatprep.subr.mxu0 0.0
        %1121 = vmatpush1.msra.mxu0 %v993
        %1122 = vmatprep.subr.mxu0 0.0
        %1123 = vmatpush1.msra.mxu0 %v992
        %1124 = vmatprep.subr.mxu0 0.0
        %1125 = vmatpush1.msra.mxu0 %v991
        %1126 = vmatprep.subr.mxu0 0.0
        %1127 = vmatpush1.msra.mxu0 %v990
        %1128 = vmatprep.subr.mxu0 0.0
        %1129 = vmatpush1.msra.mxu0 %v989
        %1130 = vmatprep.subr.mxu0 0.0
        %1131 = vmatpush2.msra.mxu0 %v1020
        %1132 = vmatprep.subr.mxu0 0.0
        %1133 = vmatpush2.msra.mxu0 %v1019
        %1134 = vmatprep.subr.mxu0 0.0
        %1135 = vmatpush2.msra.mxu0 %v1018
        %1136 = vmatprep.subr.mxu0 0.0
        %1137 = vmatpush2.msra.mxu0 %v1017
        %1138 = vmatprep.subr.mxu0 0.0
        %1139 = vmatpush2.msra.mxu0 %v1016
        %1140 = vmatprep.subr.mxu0 0.0
        %1141 = vmatpush2.msra.mxu0 %v1015
        %1142 = vmatprep.subr.mxu0 0.0
        %1143 = vmatpush2.msra.mxu0 %v1014
        %1144 = vmatprep.subr.mxu0 0.0
        %1145 = vmatpush2.msra.mxu0 %v1013
        %1146 = vmatprep.subr.mxu0 0.0
        %1147 = vmatpush2.msra.mxu0 %v1012
        %1148 = vmatprep.subr.mxu0 0.0
        %1149 = vmatpush2.msra.mxu0 %v1011
        %1150 = vmatprep.subr.mxu0 0.0
        %1151 = vmatpush2.msra.mxu0 %v1010
        %1152 = vmatprep.subr.mxu0 0.0
        %1153 = vmatpush2.msra.mxu0 %v1009
        %1154 = vmatprep.subr.mxu0 0.0
        %1155 = vmatpush2.msra.mxu0 %v1008
        %1156 = vmatprep.subr.mxu0 0.0
        %1157 = vmatpush2.msra.mxu0 %v1007
        %1158 = vmatprep.subr.mxu0 0.0
        %1159 = vmatpush2.msra.mxu0 %v1006
        %1160 = vmatprep.subr.mxu0 0.0
        %1161 = vmatpush2.msra.mxu0 %v1005
        %1162 = vmatprep.mubr.f32.mxu0 %v956
        %1163 = vmatmul.mubr.f32.gmra.mxu0 %v955
        %v1164 = vpop.f32.mrf.mxu0
        %v1165 = vadd.f32 %v1095, %v1164
        %v1166 = vpop.f32.mrf.mxu0
        %1167 = vdwg.mxu0
        %1168 = vst [vmem:[%s267] sm:$0xff] %v1165
        %s1169 = sand.u32 %s146, 1
        %s1170 = scalar_lea.sflag [#allocation4], %s1169
        %s1171 = sand.u32 %s146, 1
        %s1172 = smul.addr %s1171, 8
        %s1173 = scalar_lea.vmem [#allocation7], %s1172
        // Predicated region
        $region49: #{timestep_embedder_forward.1} parent=39 // pred_check
          %p1174 = pneg %p156
        $region50: #{timestep_embedder_forward.1} parent=39 // pred_check_branch
          %1176 = sbr.rel (%p1174) target = $region52
        $region51: #{timestep_embedder_forward.1} parent=39 // pred_region
          %s1178 = ssub.s32 128, 128
          %1179 = vsyncadd %s1170, %s1178
          %s1180 = smul.addr %s23, 128
          %s1181 = scalar_lea.hbm %s5, %s1180
          %s1183 = sshll.u32 %s1173, 4
          %s1184 = int_to_ptr.vmem [resolvable:$true] %s1183
          %1186 = dma.vmem_to_hbm [thread:$0]  %s1184, 128, %s1181, %s1170
        $region52: #{timestep_embedder_forward.1} parent=39 // pred_fallthru
          _
      $region40: #{timestep_embedder_forward.1} parent=5 // pred_fallthru
        _
      %p1187 = scmp.le.s32.totalorder 2, %s18
      // Predicated region
      $region53: #{timestep_embedder_forward.1} parent=5 // pred_check
        %p1188 = pneg %p1187
      $region54: #{timestep_embedder_forward.1} parent=5 // pred_check_branch
        %1190 = sbr.rel (%p1188) target = $region56
      $region55: #{timestep_embedder_forward.1} parent=5 // pred_region
        %s1191 = ssub.s32 %s18, 2
        // Predicated region
        $region57: #{timestep_embedder_forward.1} parent=55 // pred_check
          %p1192 = pneg %p162
        $region58: #{timestep_embedder_forward.1} parent=55 // pred_check_branch
          %1194 = sbr.rel (%p1192) target = $region60
        $region59: #{timestep_embedder_forward.1} parent=55 // pred_region
          %s1195 = sand.u32 %s147, 1
          %s1196 = scalar_lea.sflag [#allocation4], %s1195
          %s1197 = sand.u32 %s147, 1
          %s1198 = smul.addr %s1197, 8
          %s1199 = scalar_lea.vmem [#allocation7], %s1198
          %1200 = dma.done %s1196, 128
        $region60: #{timestep_embedder_forward.1} parent=55 // pred_fallthru
          _
      $region56: #{timestep_embedder_forward.1} parent=5 // pred_fallthru
        _
    $region6: #{timestep_embedder_forward.1} parent=1 // loop_footer
      %s22 = sadd.s32 1, %s18
    $region7: #{timestep_embedder_forward.1} parent=1 // loop_footer_branch
      %17 = sbr.rel target = $region3
    $region8: #{timestep_embedder_forward.1} parent=1 // loop_exit
      _
    %1201 = vsyncpa [#allocation3], 1
    %s1202 = scalar_lea.sflag [#allocation3], 1
    %1203 = vsyncpa %s1202, 1
    %1204 = vsyncpa [#allocation6], 1
    %s1205 = scalar_lea.sflag [#allocation6], 1
    %1206 = vsyncpa %s1205, 1
    %1207 = vsyncpa [#allocation4], 1
    %s1208 = scalar_lea.sflag [#allocation4], 1
    %1209 = vsyncpa %s1208, 1

</llo_original>
